<compile_context>
chip_gen: v6e
topology: v6e:2x2x1
jax: 0.10.0
libtpu: 0.0.40
codegen_flags: <defaults>
</compile_context>

<pallas_src>
import functools

import jax
import jax.numpy as jnp
import numpy as np
from jax.experimental import pallas as pl
from jax.experimental.pallas import tpu as pltpu


def _aux_ent_type_kernel(L, T,
                         alpha_ref,    # SMEM (1, 1)      f32
                         feat_ref,     # VMEM (rows, H)
                         w_ref,        # VMEM (H, Tp)
                         b_ref,        # VMEM (1, Tp)     f32
                         tgt_ref,      # VMEM (rows, Tp)  f32
                         mask_ref,     # VMEM (rows, 1)   f32
                         logits_ref,   # VMEM (rows, Tp)        (out)
                         num_ref,      # VMEM (1, 1, 1)   f32   (out: partial loss numerator)
                         den_ref):     # VMEM (1, 1, 1)   f32   (out: partial mask sum)
    # ---- linear head on the MXU (f32 accumulate) ----------------------------
    logits = jnp.dot(feat_ref[...], w_ref[...],
                     preferred_element_type=jnp.float32)
    logits = logits + b_ref[...]
    logits_ref[...] = logits.astype(logits_ref.dtype)

    alpha = alpha_ref[0, 0]
    tgt = tgt_ref[...]
    rows, t_pad = logits.shape

    # t == 0 rows (start of each sequence inside this block), built in-kernel.
    row_idx = jax.lax.broadcasted_iota(jnp.int32, (rows, 1), 0)
    first = (row_idx % L == 0).astype(jnp.float32)            # (rows, 1)

    # Valid (un-padded) type columns.
    col_idx = jax.lax.broadcasted_iota(jnp.int32, (1, t_pad), 1)
    col_ok = (col_idx < T).astype(jnp.float32)                # (1, t_pad)

    # ---- soft-target construction (the torch.no_grad() loop, vectorized) ----
    # prev[b, t] = target[b, 0]             if t == 0
    #            = sigmoid(logits[b, t-1])  otherwise
    sig = jax.lax.stop_gradient(jax.nn.sigmoid(logits))
    prev = (1.0 - first) * pltpu.roll(sig, shift=1, axis=0) + first * tgt
    soft_target = (1.0 - alpha) * tgt + alpha * prev

    # ---- BCEWithLogitsLoss(reduction='none') ---------------------------------
    # log1p(exp(-|x|)) == -log(sigmoid(|x|)); reuse the sigmoid above.
    per_elem = (jnp.maximum(logits, 0.0) - logits * soft_target
                - jnp.log(jnp.where(logits >= 0.0, sig, 1.0 - sig)))

    # ---- masked partial sums (reduced outside the kernel) --------------------
    m = mask_ref[...]                                          # (rows, 1)
    num_ref[...] = jnp.reshape(jnp.sum(per_elem * m * col_ok), (1, 1, 1))
    den_ref[...] = jnp.reshape(jnp.sum(m), (1, 1, 1))


def _pick_b_tile(B, L, H, Tp, itemsize=4, budget_bytes=4 << 20):
    """Largest batch tile (divisor of B) whose double-buffered block working
    set fits `budget_bytes` and whose row count is sublane-aligned (or covers
    the full array).  Sized conservatively so it also fits v7x's 64 MiB VMEM."""
    best = None
    for bt in range(1, B + 1):
        if B % bt:
            continue
        rows = bt * L
        if rows % 8 and bt != B:
            continue
        block_bytes = rows * (H + 3 * Tp) * itemsize * 2   # feat + tgt + logits, 2x buffered
        if block_bytes <= budget_bytes:
            best = bt
    return best if best is not None else B


@functools.partial(jax.jit, static_argnames=("b_tile",))
def aux_ent_type_tower(feature, weight, bias, target, mask, alpha, *, b_tile=None):
    """feature: (B, L, H), weight: (H, T), bias: (T,), target: (B, L, T),
    mask: (B, L), alpha: scalar.  Returns (logits (B, L, T), loss scalar)."""
    B, L, H = feature.shape
    T = weight.shape[1]
    BL = B * L
    Tp = ((T + 127) // 128) * 128          # lane-dense type dimension

    if b_tile is None:
        b_tile = _pick_b_tile(B, L, H, Tp)
    assert B % b_tile == 0, "b_tile must divide B"
    rows = b_tile * L
    assert rows % 8 == 0 or rows == BL, "row tile must be sublane-aligned"
    grid = (B // b_tile,)

    compute_dtype = feature.dtype          # keep bf16 inputs in bf16 for the MXU

    feat2d = feature.reshape(BL, H)
    w_pad = jnp.pad(weight.astype(compute_dtype), ((0, 0), (0, Tp - T)))
    b_pad = jnp.pad(bias.astype(jnp.float32).reshape(1, T), ((0, 0), (0, Tp - T)))
    tgt2d = jnp.pad(target.reshape(BL, T).astype(jnp.float32),
                    ((0, 0), (0, Tp - T)))
    mask2d = mask.reshape(BL, 1).astype(jnp.float32)
    alpha_arr = jnp.full((1, 1), alpha, jnp.float32)

    kernel = functools.partial(_aux_ent_type_kernel, L, T)

    logits_pad, num_p, den_p = pl.pallas_call(
        kernel,
        out_shape=(
            jax.ShapeDtypeStruct((BL, Tp), feature.dtype),
            jax.ShapeDtypeStruct((grid[0], 1, 1), jnp.float32),
            jax.ShapeDtypeStruct((grid[0], 1, 1), jnp.float32),
        ),
        grid=grid,
        in_specs=[
            pl.BlockSpec(memory_space=pltpu.MemorySpace.SMEM),   # alpha (scalar)
            pl.BlockSpec((rows, H), lambda i: (i, 0)),           # feature rows
            pl.BlockSpec((H, Tp), lambda i: (0, 0)),             # weight (resident)
            pl.BlockSpec((1, Tp), lambda i: (0, 0)),             # bias (resident)
            pl.BlockSpec((rows, Tp), lambda i: (i, 0)),          # target rows
            pl.BlockSpec((rows, 1), lambda i: (i, 0)),           # mask rows
        ],
        out_specs=(
            pl.BlockSpec((rows, Tp), lambda i: (i, 0)),          # logits rows
            pl.BlockSpec((1, 1, 1), lambda i: (i, 0, 0)),        # partial numerator
            pl.BlockSpec((1, 1, 1), lambda i: (i, 0, 0)),        # partial denominator
        ),
        compiler_params=pltpu.CompilerParams(
            dimension_semantics=("parallel",)),
    )(alpha_arr, feat2d, w_pad, b_pad, tgt2d, mask2d)

    logits = logits_pad[:, :T].reshape(B, L, T)
    loss = jnp.sum(num_p) / jnp.maximum(jnp.sum(den_p), 1.0)
    return logits, loss


def _reference(feature, weight, bias, target, mask, alpha):
    """Pure-JAX mirror of the PyTorch forward (is_soft_label=False)."""
    logits = jnp.einsum("blh,ht->blt", feature, weight) + bias
    B, L, T = logits.shape
    prev = target[:, 0]
    soft = []
    for t in range(L):
        mix = (1.0 - alpha) * target[:, t] + alpha * prev
        soft.append(mix[:, None])
        prev = jax.nn.sigmoid(logits[:, t])
    soft = jnp.concatenate(soft, axis=1)
    per = (jnp.maximum(logits, 0.0) - logits * soft
           + jnp.log1p(jnp.exp(-jnp.abs(logits))))
    m3 = mask[:, :, None].astype(jnp.float32)
    loss = (per * m3).sum() / jnp.maximum(m3.sum(), 1.0)
    return logits, loss


if __name__ == "__main__":
    B, L, H, T = 2, 8, 32, 16
    alpha = 0.3

    key = jax.random.PRNGKey(0)
    k_feat, k_w, k_b, k_tgt, k_mask = jax.random.split(key, 5)

    feature = jax.random.normal(k_feat, (B, L, H), dtype=jnp.float32)
    # deterministic "Linear(hidden_dim, type_size)" parameters; (H, T) == W.T
    weight = jax.random.normal(k_w, (H, T), dtype=jnp.float32) * 0.1
    bias = jax.random.normal(k_b, (T,), dtype=jnp.float32) * 0.1
    target = jax.random.uniform(k_tgt, (B, L, T), dtype=jnp.float32)
    mask = (jax.random.uniform(k_mask, (B, L)) < 0.8).astype(jnp.float32)

    # b_tile=1 -> grid of 2 row-blocks, exercises the tiled / pipelined path.
    logits, loss = aux_ent_type_tower(feature, weight, bias, target, mask,
                                      alpha, b_tile=1)
    jax.block_until_ready((logits, loss))

    ref_logits, ref_loss = _reference(feature, weight, bias, target, mask, alpha)
    np.testing.assert_allclose(np.asarray(logits), np.asarray(ref_logits),
                               rtol=1e-4, atol=1e-4)
    np.testing.assert_allclose(np.asarray(loss), np.asarray(ref_loss),
                               rtol=1e-4, atol=1e-4)

    print("KERNEL_OK")
</pallas_src>

<mosaic_0001>
module attributes {stable_mosaic.version = 11 : i64} {
  func.func @_aux_ent_type_kernel(%arg0: i32, %arg1: memref<1x1xf32, #tpu.memory_space<smem>>, %arg2: memref<8x32xf32, #tpu.memory_space<vmem>>, %arg3: memref<32x128xf32, #tpu.memory_space<vmem>>, %arg4: memref<1x128xf32, #tpu.memory_space<vmem>>, %arg5: memref<8x128xf32, #tpu.memory_space<vmem>>, %arg6: memref<8x1xf32, #tpu.memory_space<vmem>>, %arg7: memref<8x128xf32, #tpu.memory_space<vmem>>, %arg8: memref<1x1x1xf32, #tpu.memory_space<vmem>>, %arg9: memref<1x1x1xf32, #tpu.memory_space<vmem>>) attributes {dimension_semantics = [#tpu.dimension_semantics<parallel>], iteration_bounds = array<i64: 2>, scalar_prefetch = 0 : i64, scratch_operands = 0 : i64, tpu.core_type = #tpu.core_type<tc>, window_params = [{transform_indices = @transform_0, window_bounds = array<i64: 1, 1>}, {transform_indices = @transform_1, window_bounds = array<i64: 8, 32>}, {pipeline_mode = #tpu.pipeline_mode<synchronous>, transform_indices = @transform_2, window_bounds = array<i64: 32, 128>}, {pipeline_mode = #tpu.pipeline_mode<synchronous>, transform_indices = @transform_3, window_bounds = array<i64: 1, 128>}, {transform_indices = @transform_4, window_bounds = array<i64: 8, 128>}, {transform_indices = @transform_5, window_bounds = array<i64: 8, 1>}, {transform_indices = @transform_6, window_bounds = array<i64: 8, 128>}, {transform_indices = @transform_7, window_bounds = array<i64: 1, 1, 1>}, {transform_indices = @transform_8, window_bounds = array<i64: 1, 1, 1>}]} {
    %c0 = arith.constant 0 : index
    %c0_0 = arith.constant 0 : index
    %0 = vector.load %arg2[%c0, %c0_0] : memref<8x32xf32, #tpu.memory_space<vmem>>, vector<8x32xf32>
    %c0_1 = arith.constant 0 : index
    %c0_2 = arith.constant 0 : index
    %1 = vector.load %arg3[%c0_1, %c0_2] : memref<32x128xf32, #tpu.memory_space<vmem>>, vector<32x128xf32>
    %cst = arith.constant dense<0.000000e+00> : vector<8x128xf32>
    %2 = tpu.matmul %0, %1, %cst {dimension_numbers = #tpu.dot_dimension_numbers<[1], [0], [0], [1], [0, 0, 1, 1], [], []>} : vector<8x32xf32>, vector<32x128xf32>, vector<8x128xf32> -> vector<8x128xf32>
    %c0_3 = arith.constant 0 : index
    %c0_4 = arith.constant 0 : index
    %3 = vector.load %arg4[%c0_3, %c0_4] : memref<1x128xf32, #tpu.memory_space<vmem>>, vector<1x128xf32>
    %4 = vector.broadcast %3 : vector<1x128xf32> to vector<8x128xf32>
    %5 = arith.addf %2, %4 : vector<8x128xf32>
    %c0_5 = arith.constant 0 : index
    %c0_6 = arith.constant 0 : index
    %6 = vector.load %arg7[%c0_5, %c0_6] : memref<8x128xf32, #tpu.memory_space<vmem>>, vector<8x128xf32>
    tpu.vector_store %arg7[%c0_5, %c0_6], %5 {strides = array<i32>} : memref<8x128xf32, #tpu.memory_space<vmem>>, vector<8x128xf32>,
    %c0_7 = arith.constant 0 : index
    %c0_8 = arith.constant 0 : index
    %7 = memref.load %arg1[%c0_7, %c0_8] : memref<1x1xf32, #tpu.memory_space<smem>>
    %c0_9 = arith.constant 0 : index
    %c0_10 = arith.constant 0 : index
    %8 = vector.load %arg5[%c0_9, %c0_10] : memref<8x128xf32, #tpu.memory_space<vmem>>, vector<8x128xf32>
    %9 = tpu.iota {dimensions = array<i32: 0>} : vector<8x1xi32>
    %c8_i32 = arith.constant 8 : i32
    %c0_i32 = arith.constant 0 : i32
    %10 = arith.cmpi eq, %c8_i32, %c0_i32 : i32
    %c1_i32 = arith.constant 1 : i32
    %11 = arith.select %10, %c1_i32, %c8_i32 : i32
    %12 = vector.broadcast %11 : i32 to vector<8x1xi32>
    %13 = arith.remsi %9, %12 : vector<8x1xi32>
    %c0_i32_11 = arith.constant 0 : i32
    %14 = vector.broadcast %c0_i32_11 : i32 to vector<8x1xi32>
    %15 = arith.cmpi ne, %13, %14 : vector<8x1xi32>
    %c0_i32_12 = arith.constant 0 : i32
    %16 = vector.broadcast %c0_i32_12 : i32 to vector<8x1xi32>
    %17 = arith.cmpi slt, %13, %16 : vector<8x1xi32>
    %c0_i32_13 = arith.constant 0 : i32
    %18 = arith.cmpi slt, %11, %c0_i32_13 : i32
    %19 = vector.broadcast %18 : i1 to vector<8x1xi1>
    %20 = vector.broadcast %19 : vector<8x1xi1> to vector<8x1xi1>
    %21 = arith.xori %17, %20 : vector<8x1xi1>
    %22 = arith.andi %21, %15 : vector<8x1xi1>
    %23 = vector.broadcast %11 : i32 to vector<8x1xi32>
    %24 = arith.addi %13, %23 : vector<8x1xi32>
    %25 = arith.select %22, %24, %13 : vector<8x1xi1>, vector<8x1xi32>
    %c0_i32_14 = arith.constant 0 : i32
    %26 = vector.broadcast %c0_i32_14 : i32 to vector<8x1xi32>
    %27 = arith.cmpi eq, %25, %26 : vector<8x1xi32>
    %28 = arith.extui %27 : vector<8x1xi1> to vector<8x1xi32>
    %29 = arith.sitofp %28 : vector<8x1xi32> to vector<8x1xf32>
    %30 = tpu.iota {dimensions = array<i32: 1>} : vector<1x128xi32>
    %c16_i32 = arith.constant 16 : i32
    %31 = vector.broadcast %c16_i32 : i32 to vector<1x128xi32>
    %32 = arith.cmpi slt, %30, %31 : vector<1x128xi32>
    %33 = arith.extui %32 : vector<1x128xi1> to vector<1x128xi32>
    %34 = arith.sitofp %33 : vector<1x128xi32> to vector<1x128xf32>
    %35 = arith.negf %5 : vector<8x128xf32>
    %36 = math.exp %35 : vector<8x128xf32>
    %cst_15 = arith.constant 1.000000e+00 : f32
    %37 = vector.broadcast %cst_15 : f32 to vector<8x128xf32>
    %38 = arith.addf %37, %36 : vector<8x128xf32>
    %39 = arith.divf %37, %38 : vector<8x128xf32>
    %cst_16 = arith.constant 1.000000e+00 : f32
    %40 = vector.broadcast %cst_16 : f32 to vector<8x1xf32>
    %41 = arith.subf %40, %29 : vector<8x1xf32>
    %c1_i32_17 = arith.constant 1 : i32
    %42 = tpu.dynamic_rotate %39 by %c1_i32_17 dim 0 : vector<8x128xf32>, i32 -> vector<8x128xf32>
    %43 = vector.broadcast %41 : vector<8x1xf32> to vector<8x128xf32>
    %44 = arith.mulf %43, %42 : vector<8x128xf32>
    %45 = vector.broadcast %29 : vector<8x1xf32> to vector<8x128xf32>
    %46 = arith.mulf %45, %8 : vector<8x128xf32>
    %47 = arith.addf %44, %46 : vector<8x128xf32>
    %cst_18 = arith.constant 1.000000e+00 : f32
    %48 = arith.subf %cst_18, %7 : f32
    %49 = vector.broadcast %48 : f32 to vector<8x128xf32>
    %50 = arith.mulf %49, %8 : vector<8x128xf32>
    %51 = vector.broadcast %7 : f32 to vector<8x128xf32>
    %52 = arith.mulf %51, %47 : vector<8x128xf32>
    %53 = arith.addf %50, %52 : vector<8x128xf32>
    %cst_19 = arith.constant 0.000000e+00 : f32
    %54 = vector.broadcast %cst_19 : f32 to vector<8x128xf32>
    %55 = arith.maximumf %5, %54 : vector<8x128xf32>
    %56 = arith.mulf %5, %53 : vector<8x128xf32>
    %57 = arith.subf %55, %56 : vector<8x128xf32>
    %cst_20 = arith.constant 0.000000e+00 : f32
    %58 = vector.broadcast %cst_20 : f32 to vector<8x128xf32>
    %59 = arith.cmpf oge, %5, %58 : vector<8x128xf32>
    %cst_21 = arith.constant 1.000000e+00 : f32
    %60 = vector.broadcast %cst_21 : f32 to vector<8x128xf32>
    %61 = arith.subf %60, %39 : vector<8x128xf32>
    %62 = arith.select %59, %39, %61 : vector<8x128xi1>, vector<8x128xf32>
    %63 = math.log %62 : vector<8x128xf32>
    %64 = arith.subf %57, %63 : vector<8x128xf32>
    %c0_22 = arith.constant 0 : index
    %c0_23 = arith.constant 0 : index
    %65 = vector.load %arg6[%c0_22, %c0_23] : memref<8x1xf32, #tpu.memory_space<vmem>>, vector<8x1xf32>
    %66 = vector.broadcast %65 : vector<8x1xf32> to vector<8x128xf32>
    %67 = arith.mulf %64, %66 : vector<8x128xf32>
    %68 = vector.broadcast %34 : vector<1x128xf32> to vector<8x128xf32>
    %69 = arith.mulf %67, %68 : vector<8x128xf32>
    %70 = vector.shape_cast %69 : vector<8x128xf32> to vector<1x8x128xf32>
    %cst_24 = arith.constant dense<0.000000e+00> : vector<1xf32>
    %71 = vector.multi_reduction <add>, %70, %cst_24 [1, 2] : vector<1x8x128xf32> to vector<1xf32>
    %72 = vector.shape_cast %71 : vector<1xf32> to vector<1x1x1xf32>
    %73 = vector.extract %72[0, 0, 0] : f32 from vector<1x1x1xf32>
    %74 = vector.broadcast %73 : f32 to vector<1x1x1xf32>
    %c0_25 = arith.constant 0 : index
    %c0_26 = arith.constant 0 : index
    %c0_27 = arith.constant 0 : index
    %75 = vector.load %arg8[%c0_25, %c0_26, %c0_27] : memref<1x1x1xf32, #tpu.memory_space<vmem>>, vector<1x1x1xf32>
    tpu.vector_store %arg8[%c0_25, %c0_26, %c0_27], %74 {strides = array<i32>} : memref<1x1x1xf32, #tpu.memory_space<vmem>>, vector<1x1x1xf32>,
    %76 = vector.shape_cast %65 : vector<8x1xf32> to vector<1x8x1xf32>
    %cst_28 = arith.constant dense<0.000000e+00> : vector<1xf32>
    %77 = vector.multi_reduction <add>, %76, %cst_28 [1, 2] : vector<1x8x1xf32> to vector<1xf32>
    %78 = vector.shape_cast %77 : vector<1xf32> to vector<1x1x1xf32>
    %79 = vector.extract %78[0, 0, 0] : f32 from vector<1x1x1xf32>
    %80 = vector.broadcast %79 : f32 to vector<1x1x1xf32>
    %c0_29 = arith.constant 0 : index
    %c0_30 = arith.constant 0 : index
    %c0_31 = arith.constant 0 : index
    %81 = vector.load %arg9[%c0_29, %c0_30, %c0_31] : memref<1x1x1xf32, #tpu.memory_space<vmem>>, vector<1x1x1xf32>
    tpu.vector_store %arg9[%c0_29, %c0_30, %c0_31], %80 {strides = array<i32>} : memref<1x1x1xf32, #tpu.memory_space<vmem>>, vector<1x1x1xf32>,
    return
  }
  func.func @transform_0(%arg0: i32) -> (i32, i32) {
    %c0_i32 = arith.constant 0 : i32
    %c0_i32_0 = arith.constant 0 : i32
    %c0_i32_1 = arith.constant 0 : i32
    return %c0_i32, %c0_i32_0 : i32, i32
  }
  func.func @transform_1(%arg0: i32) -> (i32, i32) {
    %c0_i32 = arith.constant 0 : i32
    %c0_i32_0 = arith.constant 0 : i32
    return %arg0, %c0_i32 : i32, i32
  }
  func.func @transform_2(%arg0: i32) -> (i32, i32) {
    %c0_i32 = arith.constant 0 : i32
    %c0_i32_0 = arith.constant 0 : i32
    %c0_i32_1 = arith.constant 0 : i32
    return %c0_i32, %c0_i32_0 : i32, i32
  }
  func.func @transform_3(%arg0: i32) -> (i32, i32) {
    %c0_i32 = arith.constant 0 : i32
    %c0_i32_0 = arith.constant 0 : i32
    %c0_i32_1 = arith.constant 0 : i32
    return %c0_i32, %c0_i32_0 : i32, i32
  }
  func.func @transform_4(%arg0: i32) -> (i32, i32) {
    %c0_i32 = arith.constant 0 : i32
    %c0_i32_0 = arith.constant 0 : i32
    return %arg0, %c0_i32 : i32, i32
  }
  func.func @transform_5(%arg0: i32) -> (i32, i32) {
    %c0_i32 = arith.constant 0 : i32
    %c0_i32_0 = arith.constant 0 : i32
    return %arg0, %c0_i32 : i32, i32
  }
  func.func @transform_6(%arg0: i32) -> (i32, i32) {
    %c0_i32 = arith.constant 0 : i32
    %c0_i32_0 = arith.constant 0 : i32
    return %arg0, %c0_i32 : i32, i32
  }
  func.func @transform_7(%arg0: i32) -> (i32, i32, i32) {
    %c0_i32 = arith.constant 0 : i32
    %c0_i32_0 = arith.constant 0 : i32
    %c0_i32_1 = arith.constant 0 : i32
    return %arg0, %c0_i32, %c0_i32_0 : i32, i32, i32
  }
  func.func @transform_8(%arg0: i32) -> (i32, i32, i32) {
    %c0_i32 = arith.constant 0 : i32
    %c0_i32_0 = arith.constant 0 : i32
    %c0_i32_1 = arith.constant 0 : i32
    return %arg0, %c0_i32, %c0_i32_0 : i32, i32, i32
  }
}

</mosaic_0001>

<llo_original>
// kernel: aux_ent_type_tower.1
$region0: #{aux_ent_type_tower.1}
  #allocation0 [shape = 'u32[]', space=smem, size = 0x4, offset = 0x4, fixed_abs, tag = 'smem constant byte address 0x4 - core index']
  #allocation1 [shape = 'u32[144,128]{1,0:T(1,128)}', space=vmem, size = 0x12000, scoped, tag = 'internal scratch']
  #allocation2 [shape = 'f32[1,1]{1,0:T(1,128)S(6)}', space=smem, size = 0x200, scoped, tag = 'scoped memory for aux_ent_type_tower.1']
  %s0 = inlined_call_operand.<no memory space> [shape: f32[1,1], index: 0, kind: input, shape index: {}]
  %s1 = inlined_call_operand.vmem [shape: f32[16,32], index: 1, kind: input, shape index: {}]
  %s2 = inlined_call_operand.vmem [shape: f32[32,128], index: 2, kind: input, shape index: {}]
  %s3 = inlined_call_operand.vmem [shape: f32[1,128], index: 3, kind: input, shape index: {}]
  %s4 = inlined_call_operand.vmem [shape: f32[16,128], index: 4, kind: input, shape index: {}]
  %s5 = inlined_call_operand.vmem [shape: f32[16,1], index: 5, kind: input, shape index: {}]
  %s6 = inlined_call_operand.vmem [shape: f32[16,128], index: 6, kind: output, shape index: {0}]
  %s7 = inlined_call_operand.vmem [shape: f32[2,1,1], index: 7, kind: output, shape index: {1}]
  %s8 = inlined_call_operand.vmem [shape: f32[2,1,1], index: 8, kind: output, shape index: {2}]
  %9 = xla_tuple %s6, %s7, %s8
  %s10 = sld [smem:[#allocation0]]
  $region73: #{aux_ent_type_tower.1} parent=0
    _
  %s12 = ssub.s32 1, %s10
  %s13 = scalar_select 0, %s12, %s10
  %14 = sst [smem:[#allocation2]] %s0
  loop: start=0, step=1, limit=4
  $region2: #{aux_ent_type_tower.1} parent=0 // loop_pre_header
    _
  $region3: #{aux_ent_type_tower.1} parent=0 // loop_header
    %s16 = sphi 0, %s20
    %p17 = scmp.ge.s32.totalorder %s16, 4
    %s24 = sphi 0, %s24
    %s26 = sphi 0, %s24
    %s27 = sphi 0, %s26
    %s41 = sphi 0, %s27
    %s47 = sphi 0, %s49
    %s50 = sphi 0, %s47
    %s51 = sphi 0, %s50
    %s67 = sphi 0, %s51
    %s71 = sphi 0, %s71
    %s73 = sphi 0, %s71
    %s74 = sphi 0, %s73
    %s88 = sphi 0, %s74
    %s92 = sphi 0, %s92
    %s94 = sphi 0, %s92
    %s95 = sphi 0, %s94
    %s109 = sphi 0, %s95
    %s115 = sphi 0, %s117
    %s118 = sphi 0, %s115
    %s119 = sphi 0, %s118
    %s135 = sphi 0, %s119
    %s141 = sphi 0, %s143
    %s144 = sphi 0, %s141
    %s145 = sphi 0, %s144
    %s161 = sphi 0, %s145
    %s167 = sphi 0, %s169
    %s170 = sphi 0, %s167
    %s171 = sphi 0, %s170
    %s187 = sphi 0, %s171
    %s193 = sphi 0, %s195
    %s196 = sphi 0, %s193
    %s197 = sphi 0, %s196
    %s213 = sphi 0, %s197
    %s219 = sphi 0, %s221
    %s222 = sphi 0, %s219
    %s223 = sphi 0, %s222
    %s239 = sphi 0, %s223
  $region4: #{aux_ent_type_tower.1} parent=0 // loop_header_branch
    %19 = sbr.rel (%p17) target = $region8
  $region5: #{aux_ent_type_tower.1} parent=0 // loop_body
    %s21 = ssub.s32 %s16, 1
    %s22 = ssub.s32 %s16, 2
    %s23 = sadd.s32 %s16, 1
    %s25 = sadd.s32 %s24, 1
    %p28 = scmp.eq.s32.totalorder %s16, 1
    %p29 = scmp.ne.s32.totalorder %s24, %s26
    %p30 = scmp.eq.s32.totalorder %s16, 0
    %p31 = por %p29, %p30
    %p32 = scmp.ne.s32.totalorder %s24, %s26
    %p33 = scmp.eq.s32.totalorder %s21, 1
    %p34 = por %p32, %p33
    %p35 = scmp.ne.s32.totalorder %s26, %s27
    %p36 = scmp.eq.s32.totalorder %s21, 0
    %p37 = por %p35, %p36
    %p38 = scmp.ne.s32.totalorder %s26, %s27
    %p39 = scmp.eq.s32.totalorder %s22, 1
    %p40 = por %p38, %p39
    %p42 = scmp.ne.s32.totalorder %s27, %s41
    %p43 = scmp.eq.s32.totalorder %s22, 0
    %p44 = por %p42, %p43
    %s45 = ssub.s32 %s16, %s23
    %p46 = scmp.eq.s32.totalorder %s45, 0
    %s48 = sadd.s32 %s47, 1
    %s49 = scalar_select %p46, %s47, %s48
    %p52 = pneg %p46
    %p53 = scmp.eq.s32.totalorder %s16, 1
    %p54 = por %p52, %p53
    %p55 = scmp.ne.s32.totalorder %s47, %s50
    %p56 = scmp.eq.s32.totalorder %s16, 0
    %p57 = por %p55, %p56
    %p58 = scmp.ne.s32.totalorder %s47, %s50
    %p59 = scmp.eq.s32.totalorder %s21, 1
    %p60 = por %p58, %p59
    %p61 = scmp.ne.s32.totalorder %s50, %s51
    %p62 = scmp.eq.s32.totalorder %s21, 0
    %p63 = por %p61, %p62
    %p64 = scmp.ne.s32.totalorder %s50, %s51
    %p65 = scmp.eq.s32.totalorder %s22, 1
    %p66 = por %p64, %p65
    %p68 = scmp.ne.s32.totalorder %s51, %s67
    %p69 = scmp.eq.s32.totalorder %s22, 0
    %p70 = por %p68, %p69
    %s72 = sadd.s32 %s71, 1
    %p75 = scmp.eq.s32.totalorder %s16, 1
    %p76 = scmp.ne.s32.totalorder %s71, %s73
    %p77 = scmp.eq.s32.totalorder %s16, 0
    %p78 = por %p76, %p77
    %p79 = scmp.ne.s32.totalorder %s71, %s73
    %p80 = scmp.eq.s32.totalorder %s21, 1
    %p81 = por %p79, %p80
    %p82 = scmp.ne.s32.totalorder %s73, %s74
    %p83 = scmp.eq.s32.totalorder %s21, 0
    %p84 = por %p82, %p83
    %p85 = scmp.ne.s32.totalorder %s73, %s74
    %p86 = scmp.eq.s32.totalorder %s22, 1
    %p87 = por %p85, %p86
    %p89 = scmp.ne.s32.totalorder %s74, %s88
    %p90 = scmp.eq.s32.totalorder %s22, 0
    %p91 = por %p89, %p90
    %s93 = sadd.s32 %s92, 1
    %p96 = scmp.eq.s32.totalorder %s16, 1
    %p97 = scmp.ne.s32.totalorder %s92, %s94
    %p98 = scmp.eq.s32.totalorder %s16, 0
    %p99 = por %p97, %p98
    %p100 = scmp.ne.s32.totalorder %s92, %s94
    %p101 = scmp.eq.s32.totalorder %s21, 1
    %p102 = por %p100, %p101
    %p103 = scmp.ne.s32.totalorder %s94, %s95
    %p104 = scmp.eq.s32.totalorder %s21, 0
    %p105 = por %p103, %p104
    %p106 = scmp.ne.s32.totalorder %s94, %s95
    %p107 = scmp.eq.s32.totalorder %s22, 1
    %p108 = por %p106, %p107
    %p110 = scmp.ne.s32.totalorder %s95, %s109
    %p111 = scmp.eq.s32.totalorder %s22, 0
    %p112 = por %p110, %p111
    %s113 = ssub.s32 %s16, %s23
    %p114 = scmp.eq.s32.totalorder %s113, 0
    %s116 = sadd.s32 %s115, 1
    %s117 = scalar_select %p114, %s115, %s116
    %p120 = pneg %p114
    %p121 = scmp.eq.s32.totalorder %s16, 1
    %p122 = por %p120, %p121
    %p123 = scmp.ne.s32.totalorder %s115, %s118
    %p124 = scmp.eq.s32.totalorder %s16, 0
    %p125 = por %p123, %p124
    %p126 = scmp.ne.s32.totalorder %s115, %s118
    %p127 = scmp.eq.s32.totalorder %s21, 1
    %p128 = por %p126, %p127
    %p129 = scmp.ne.s32.totalorder %s118, %s119
    %p130 = scmp.eq.s32.totalorder %s21, 0
    %p131 = por %p129, %p130
    %p132 = scmp.ne.s32.totalorder %s118, %s119
    %p133 = scmp.eq.s32.totalorder %s22, 1
    %p134 = por %p132, %p133
    %p136 = scmp.ne.s32.totalorder %s119, %s135
    %p137 = scmp.eq.s32.totalorder %s22, 0
    %p138 = por %p136, %p137
    %s139 = ssub.s32 %s16, %s23
    %p140 = scmp.eq.s32.totalorder %s139, 0
    %s142 = sadd.s32 %s141, 1
    %s143 = scalar_select %p140, %s141, %s142
    %p146 = pneg %p140
    %p147 = scmp.eq.s32.totalorder %s16, 1
    %p148 = por %p146, %p147
    %p149 = scmp.ne.s32.totalorder %s141, %s144
    %p150 = scmp.eq.s32.totalorder %s16, 0
    %p151 = por %p149, %p150
    %p152 = scmp.ne.s32.totalorder %s141, %s144
    %p153 = scmp.eq.s32.totalorder %s21, 1
    %p154 = por %p152, %p153
    %p155 = scmp.ne.s32.totalorder %s144, %s145
    %p156 = scmp.eq.s32.totalorder %s21, 0
    %p157 = por %p155, %p156
    %p158 = scmp.ne.s32.totalorder %s144, %s145
    %p159 = scmp.eq.s32.totalorder %s22, 1
    %p160 = por %p158, %p159
    %p162 = scmp.ne.s32.totalorder %s145, %s161
    %p163 = scmp.eq.s32.totalorder %s22, 0
    %p164 = por %p162, %p163
    %s165 = ssub.s32 %s16, %s23
    %p166 = scmp.eq.s32.totalorder %s165, 0
    %s168 = sadd.s32 %s167, 1
    %s169 = scalar_select %p166, %s167, %s168
    %p172 = pneg %p166
    %p173 = scmp.eq.s32.totalorder %s16, 1
    %p174 = por %p172, %p173
    %p175 = scmp.ne.s32.totalorder %s167, %s170
    %p176 = scmp.eq.s32.totalorder %s16, 0
    %p177 = por %p175, %p176
    %p178 = scmp.ne.s32.totalorder %s167, %s170
    %p179 = scmp.eq.s32.totalorder %s21, 1
    %p180 = por %p178, %p179
    %p181 = scmp.ne.s32.totalorder %s170, %s171
    %p182 = scmp.eq.s32.totalorder %s21, 0
    %p183 = por %p181, %p182
    %p184 = scmp.ne.s32.totalorder %s170, %s171
    %p185 = scmp.eq.s32.totalorder %s22, 1
    %p186 = por %p184, %p185
    %p188 = scmp.ne.s32.totalorder %s171, %s187
    %p189 = scmp.eq.s32.totalorder %s22, 0
    %p190 = por %p188, %p189
    %s191 = ssub.s32 %s16, %s23
    %p192 = scmp.eq.s32.totalorder %s191, 0
    %s194 = sadd.s32 %s193, 1
    %s195 = scalar_select %p192, %s193, %s194
    %p198 = pneg %p192
    %p199 = scmp.eq.s32.totalorder %s16, 1
    %p200 = por %p198, %p199
    %p201 = scmp.ne.s32.totalorder %s193, %s196
    %p202 = scmp.eq.s32.totalorder %s16, 0
    %p203 = por %p201, %p202
    %p204 = scmp.ne.s32.totalorder %s193, %s196
    %p205 = scmp.eq.s32.totalorder %s21, 1
    %p206 = por %p204, %p205
    %p207 = scmp.ne.s32.totalorder %s196, %s197
    %p208 = scmp.eq.s32.totalorder %s21, 0
    %p209 = por %p207, %p208
    %p210 = scmp.ne.s32.totalorder %s196, %s197
    %p211 = scmp.eq.s32.totalorder %s22, 1
    %p212 = por %p210, %p211
    %p214 = scmp.ne.s32.totalorder %s197, %s213
    %p215 = scmp.eq.s32.totalorder %s22, 0
    %p216 = por %p214, %p215
    %s217 = ssub.s32 %s16, %s23
    %p218 = scmp.eq.s32.totalorder %s217, 0
    %s220 = sadd.s32 %s219, 1
    %s221 = scalar_select %p218, %s219, %s220
    %p224 = pneg %p218
    %p225 = scmp.eq.s32.totalorder %s16, 1
    %p226 = por %p224, %p225
    %p227 = scmp.ne.s32.totalorder %s219, %s222
    %p228 = scmp.eq.s32.totalorder %s16, 0
    %p229 = por %p227, %p228
    %p230 = scmp.ne.s32.totalorder %s219, %s222
    %p231 = scmp.eq.s32.totalorder %s21, 1
    %p232 = por %p230, %p231
    %p233 = scmp.ne.s32.totalorder %s222, %s223
    %p234 = scmp.eq.s32.totalorder %s21, 0
    %p235 = por %p233, %p234
    %p236 = scmp.ne.s32.totalorder %s222, %s223
    %p237 = scmp.eq.s32.totalorder %s22, 1
    %p238 = por %p236, %p237
    %p240 = scmp.ne.s32.totalorder %s223, %s239
    %p241 = scmp.eq.s32.totalorder %s22, 0
    %p242 = por %p240, %p241
    %p243 = scmp.le.s32.totalorder 1, %s16
    %p244 = scmp.lt.s32.totalorder %s16, 3
    %p245 = pnand %p243, %p244
    %p246 = pneg %p245
    // Predicated region
    $region9: #{aux_ent_type_tower.1} parent=5 // pred_check
      _
    $region10: #{aux_ent_type_tower.1} parent=5 // pred_check_branch
      %248 = sbr.rel (%p245) target = $region12
    $region11: #{aux_ent_type_tower.1} parent=5 // pred_region
      %s249 = ssub.s32 %s16, 1
      // Predicated region
      $region13: #{aux_ent_type_tower.1} parent=11 // pred_check
        %p250 = pneg %p37
      $region14: #{aux_ent_type_tower.1} parent=11 // pred_check_branch
        %252 = sbr.rel (%p250) target = $region16
      $region15: #{aux_ent_type_tower.1} parent=11 // pred_region
        _
      $region16: #{aux_ent_type_tower.1} parent=11 // pred_fallthru
        _
      // Predicated region
      $region17: #{aux_ent_type_tower.1} parent=11 // pred_check
        %p253 = pneg %p84
      $region18: #{aux_ent_type_tower.1} parent=11 // pred_check_branch
        %255 = sbr.rel (%p253) target = $region20
      $region19: #{aux_ent_type_tower.1} parent=11 // pred_region
        _
      $region20: #{aux_ent_type_tower.1} parent=11 // pred_fallthru
        _
      // Predicated region
      $region21: #{aux_ent_type_tower.1} parent=11 // pred_check
        %p256 = pneg %p105
      $region22: #{aux_ent_type_tower.1} parent=11 // pred_check_branch
        %258 = sbr.rel (%p256) target = $region24
      $region23: #{aux_ent_type_tower.1} parent=11 // pred_region
        _
      $region24: #{aux_ent_type_tower.1} parent=11 // pred_fallthru
        _
    $region12: #{aux_ent_type_tower.1} parent=5 // pred_fallthru
      _
    %p259 = scmp.lt.s32.totalorder %s16, 2
    // Predicated region
    $region25: #{aux_ent_type_tower.1} parent=5 // pred_check
      %p260 = pneg %p259
    $region26: #{aux_ent_type_tower.1} parent=5 // pred_check_branch
      %262 = sbr.rel (%p260) target = $region28
    $region27: #{aux_ent_type_tower.1} parent=5 // pred_region
      // Predicated region
      $region29: #{aux_ent_type_tower.1} parent=27 // pred_check
        %p263 = pneg %p57
      $region30: #{aux_ent_type_tower.1} parent=27 // pred_check_branch
        %265 = sbr.rel (%p263) target = $region32
      $region31: #{aux_ent_type_tower.1} parent=27 // pred_region
        %p266 = scmp.lt.s32.totalorder %s16, 1
        %s267 = scalar_select %p266, %s16, 1
        %s268 = smul.addr %s267, 8
        %s269 = scalar_lea.vmem %s1, %s268
      $region32: #{aux_ent_type_tower.1} parent=27 // pred_fallthru
        _
      // Predicated region
      $region33: #{aux_ent_type_tower.1} parent=27 // pred_check
        %p270 = pneg %p125
      $region34: #{aux_ent_type_tower.1} parent=27 // pred_check_branch
        %272 = sbr.rel (%p270) target = $region36
      $region35: #{aux_ent_type_tower.1} parent=27 // pred_region
        %p273 = scmp.lt.s32.totalorder %s16, 1
        %s274 = scalar_select %p273, %s16, 1
        %s275 = smul.addr %s274, 8
        %s276 = scalar_lea.vmem %s4, %s275
      $region36: #{aux_ent_type_tower.1} parent=27 // pred_fallthru
        _
      // Predicated region
      $region37: #{aux_ent_type_tower.1} parent=27 // pred_check
        %p277 = pneg %p151
      $region38: #{aux_ent_type_tower.1} parent=27 // pred_check_branch
        %279 = sbr.rel (%p277) target = $region40
      $region39: #{aux_ent_type_tower.1} parent=27 // pred_region
        %p280 = scmp.lt.s32.totalorder %s16, 1
        %s281 = scalar_select %p280, %s16, 1
        %s282 = smul.addr %s281, 8
        %s283 = scalar_lea.vmem %s5, %s282
      $region40: #{aux_ent_type_tower.1} parent=27 // pred_fallthru
        _
    $region28: #{aux_ent_type_tower.1} parent=5 // pred_fallthru
      _
    %p284 = scmp.le.s32.totalorder 1, %s16
    %p285 = scmp.lt.s32.totalorder %s16, 3
    %p286 = pnand %p284, %p285
    %p287 = pneg %p286
    // Predicated region
    $region41: #{aux_ent_type_tower.1} parent=5 // pred_check
      _
    $region42: #{aux_ent_type_tower.1} parent=5 // pred_check_branch
      %289 = sbr.rel (%p286) target = $region44
    $region43: #{aux_ent_type_tower.1} parent=5 // pred_region
      %s290 = ssub.s32 %s16, 1
      %p291 = pneg %p37
      %p292 = pneg %p34
      %p293 = scmp.lt.s32.totalorder %s21, 1
      %s294 = scalar_select %p293, %s21, 1
      %s295 = smul.addr %s294, 8
      %s296 = scalar_lea.vmem %s1, %s295
      %p297 = pneg %p63
      %p298 = pneg %p60
      %p299 = pneg %p84
      %p300 = pneg %p81
      %p301 = pneg %p105
      %p302 = pneg %p102
      %p303 = scmp.lt.s32.totalorder %s21, 1
      %s304 = scalar_select %p303, %s21, 1
      %s305 = smul.addr %s304, 8
      %s306 = scalar_lea.vmem %s4, %s305
      %p307 = pneg %p131
      %p308 = pneg %p128
      %p309 = scmp.lt.s32.totalorder %s21, 1
      %s310 = scalar_select %p309, %s21, 1
      %s311 = smul.addr %s310, 8
      %s312 = scalar_lea.vmem %s5, %s311
      %p313 = pneg %p157
      %p314 = pneg %p154
      %p315 = pneg %p183
      %p316 = pneg %p180
      %p317 = scmp.lt.s32.totalorder %s21, 1
      %s318 = scalar_select %p317, %s21, 1
      %s319 = smul.addr %s318, 8
      %s320 = scalar_lea.vmem %s6, %s319
      %p321 = pneg %p209
      %p322 = pneg %p206
      %p323 = scmp.lt.s32.totalorder %s21, 1
      %s324 = scalar_select %p323, %s21, 1
      %s325 = scalar_lea.vmem %s7, %s324
      %p326 = pneg %p235
      %p327 = pneg %p232
      %p328 = scmp.lt.s32.totalorder %s21, 1
      %s329 = scalar_select %p328, %s21, 1
      %s330 = scalar_lea.vmem %s8, %s329
      %p331 = scmp.lt.s32.totalorder %s21, 1
      %s332 = scalar_select %p331, %s21, 1
      %s333 = smul.addr %s332, 8
      %s334 = scalar_lea.vmem %s1, %s333
      %p335 = scmp.lt.s32.totalorder %s21, 1
      %s336 = scalar_select %p335, %s21, 1
      %s337 = smul.addr %s336, 8
      %s338 = scalar_lea.vmem %s4, %s337
      %p339 = scmp.lt.s32.totalorder %s21, 1
      %s340 = scalar_select %p339, %s21, 1
      %s341 = smul.addr %s340, 8
      %s342 = scalar_lea.vmem %s5, %s341
      %p343 = scmp.lt.s32.totalorder %s21, 1
      %s344 = scalar_select %p343, %s21, 1
      %s345 = smul.addr %s344, 8
      %s346 = scalar_lea.vmem %s6, %s345
      %p347 = scmp.lt.s32.totalorder %s21, 1
      %s348 = scalar_select %p347, %s21, 1
      %s349 = scalar_lea.vmem %s7, %s348
      %p350 = scmp.lt.s32.totalorder %s21, 1
      %s351 = scalar_select %p350, %s21, 1
      %s352 = scalar_lea.vmem %s8, %s351
      %v353 = vld [vmem:[%s334] sm:$0xff]
      %v354 = vld [vmem:[%s2] sm:$0xff]
      %v355 = vld [vmem:[%s2 + $0x8] sm:$0xff]
      %v356 = vld [vmem:[%s2 + $0x10] sm:$0xff]
      %v357 = vld [vmem:[%s2 + $0x18] sm:$0xff]
      %v358 = vld [vmem:[%s3] sm:$0x1]
      %v360 = vlaneseq
      %v361 = vshrl.u32 %v360, 7
      %v362 = vsub.s32 0, %v361
      %v363 = vrot.slane %v358, %v362
      %vm365 = vcmask 261120
      %v367 = vsel %vm365, %v353, 0
      %369 = vmatprep.subr.mxu0 0.0
      %370 = vmatpush1.msra.mxu0 0.0
      %371 = vmatprep.subr.mxu0 0.0
      %372 = vmatpush1.msra.mxu0 0.0
      %373 = vmatprep.subr.mxu0 0.0
      %374 = vmatpush1.msra.mxu0 0.0
      %375 = vmatprep.subr.mxu0 0.0
      %376 = vmatpush1.msra.mxu0 0.0
      %377 = vmatprep.subr.mxu0 0.0
      %378 = vmatpush1.msra.mxu0 0.0
      %379 = vmatprep.subr.mxu0 0.0
      %380 = vmatpush1.msra.mxu0 0.0
      %381 = vmatprep.subr.mxu0 0.0
      %382 = vmatpush1.msra.mxu0 0.0
      %383 = vmatprep.subr.mxu0 0.0
      %384 = vmatpush1.msra.mxu0 0.0
      %385 = vmatprep.subr.mxu0 0.0
      %386 = vmatpush1.msra.mxu0 0.0
      %387 = vmatprep.subr.mxu0 0.0
      %388 = vmatpush1.msra.mxu0 0.0
      %389 = vmatprep.subr.mxu0 0.0
      %390 = vmatpush1.msra.mxu0 0.0
      %391 = vmatprep.subr.mxu0 0.0
      %392 = vmatpush1.msra.mxu0 0.0
      %393 = vmatprep.subr.mxu0 0.0
      %394 = vmatpush1.msra.mxu0 %v357
      %395 = vmatprep.subr.mxu0 0.0
      %396 = vmatpush1.msra.mxu0 %v356
      %397 = vmatprep.subr.mxu0 0.0
      %398 = vmatpush1.msra.mxu0 %v355
      %399 = vmatprep.subr.mxu0 0.0
      %400 = vmatpush1.msra.mxu0 %v354
      %401 = vmatprep.subr.mxu0 0.0
      %402 = vmatpush2.msra.mxu0 0.0
      %403 = vmatprep.subr.mxu0 0.0
      %404 = vmatpush2.msra.mxu0 0.0
      %405 = vmatprep.subr.mxu0 0.0
      %406 = vmatpush2.msra.mxu0 0.0
      %407 = vmatprep.subr.mxu0 0.0
      %408 = vmatpush2.msra.mxu0 0.0
      %409 = vmatprep.subr.mxu0 0.0
      %410 = vmatpush2.msra.mxu0 0.0
      %411 = vmatprep.subr.mxu0 0.0
      %412 = vmatpush2.msra.mxu0 0.0
      %413 = vmatprep.subr.mxu0 0.0
      %414 = vmatpush2.msra.mxu0 0.0
      %415 = vmatprep.subr.mxu0 0.0
      %416 = vmatpush2.msra.mxu0 0.0
      %417 = vmatprep.subr.mxu0 0.0
      %418 = vmatpush2.msra.mxu0 0.0
      %419 = vmatprep.subr.mxu0 0.0
      %420 = vmatpush2.msra.mxu0 0.0
      %421 = vmatprep.subr.mxu0 0.0
      %422 = vmatpush2.msra.mxu0 0.0
      %423 = vmatprep.subr.mxu0 0.0
      %424 = vmatpush2.msra.mxu0 0.0
      %425 = vmatprep.subr.mxu0 0.0
      %426 = vmatpush2.msra.mxu0 0.0
      %427 = vmatprep.subr.mxu0 0.0
      %428 = vmatpush2.msra.mxu0 0.0
      %429 = vmatprep.subr.mxu0 0.0
      %430 = vmatpush2.msra.mxu0 0.0
      %431 = vmatprep.subr.mxu0 0.0
      %432 = vmatpush2.msra.mxu0 0.0
      %433 = vmatprep.mubr.f32.mxu0 0.0
      %434 = vmatmul.mubr.f32.gmra.mxu0 %v367
      %v435 = vpop.f32.mrf.mxu0
      %v436 = vadd.f32 %v363, %v435
      %v437 = vpop.f32.mrf.mxu0
      %438 = vdwg.mxu0
      %439 = vst [vmem:[%s346] sm:$0xff] %v436
      %s440 = sld [smem:[#allocation2]]
      %v441 = vld [vmem:[%s338] sm:$0xff]
      %v442 = vlaneseq
      %v443 = vshrl.u32 %v442, 7
      %vm444 = vcmp.lt.s32.totalorder %v443, 0
      %v445 = vsub.s32 0, %v443
      %v446 = vsel %vm444, %v445, %v443
      %v447 = vshrl.u32 %v446, 3
      %v448 = vand.u32 %v446, 7
      %v449 = vsub.s32 0, %v448
      %v450 = vsel %vm444, %v449, %v448
      %vm451 = vcmp.ne.s32.totalorder %v450, 0
      %vm452 = vcmp.lt.s32.totalorder %v450, 0
      %vm453 = vmand %vm452, %vm451
      %v454 = vadd.s32 %v450, 8
      %v455 = vsel %vm453, %v454, %v450
      %vm456 = vcmp.eq.s32.totalorder %v455, 0
      %v457 = vsel %vm456, 1, 0
      %v458 = vcvt.s32.f32 %v457
      %v459 = vlaneseq
      %v460 = vand.u32 %v459, 127
      %vm461 = vcmp.lt.s32.totalorder %v460, 16
      %v462 = vsel %vm461, 1, 0
      %v463 = vcvt.s32.f32 %v462
      %v464 = vxor.u32 %v436, 2147483648
      %v465 = vmul.f32 %v464, 1.442695
      %v466 = vpow.pop %v465
      %v467 = vadd.f32 %v466, 1.0
      %v468 = vrcp.pop %v467
      %v469 = vmul.f32 1.0, %v468
      %v470 = vsub.f32 1.0, %v458
      %v471 = vrot.slane %v469, 7
      %v472 = vmul.f32 %v470, %v471
      %v473 = vmul.f32 %v458, %v441
      %v474 = vadd.f32 %v472, %v473
      %s475 = ssub.f32 1.0, %s440
      %v476 = vstv %s475
      %v477 = vmul.f32 %v476, %v441
      %v478 = vstv %s440
      %v479 = vmul.f32 %v478, %v474
      %v480 = vadd.f32 %v477, %v479
      %v481 = vmax.f32 %v436, 0.0
      %v482 = vmul.f32 %v436, %v480
      %v483 = vsub.f32 %v481, %v482
      %vm484 = vcmp.ge.f32.partialorder %v436, 0.0
      %v485 = vsub.f32 1.0, %v469
      %v486 = vsel %vm484, %v469, %v485
      %v487 = vlog2.pop %v486
      %v488 = vmul.f32 %v487, 0.6931472
      %v489 = vsub.f32 %v483, %v488
      %v490 = vld [vmem:[%s342] sm:$0xff]
      %492 = vset.pattern.permute.xlu0 0
      %493 = vperm.xlu0 %492, %v490
      %v494 = vpop.permute.xlu0 %493
      %v496 = vmul.f32 %v489, %v494
      %v497 = vmul.f32 %v496, %v463
      %498 = vadd.xlane.f32.xlu0 %v497
      %v499 = vpop.xlane.xlu0 %498
      %v500 = vrot.slane %v499, 4
      %v501 = vadd.f32 %v499, %v500
      %v502 = vrot.slane %v501, 2
      %v503 = vadd.f32 %v501, %v502
      %v504 = vrot.slane %v503, 1
      %v505 = vadd.f32 %v503, %v504
      %s506 = vtos %v505
      %v507 = vstv %s506
      %vm508 = vcmask 0
      %509 = vst.msk [vmem:[%s349] sm:$0x1] %vm508, %v507
      %vm510 = vcmask 7168
      %v511 = vsel %vm510, %v490, 0.0
      %512 = vadd.xlane.f32.xlu0 %v511
      %v513 = vpop.xlane.xlu0 %512
      %v514 = vrot.slane %v513, 4
      %v515 = vadd.f32 %v513, %v514
      %v516 = vrot.slane %v515, 2
      %v517 = vadd.f32 %v515, %v516
      %v518 = vrot.slane %v517, 1
      %v519 = vadd.f32 %v517, %v518
      %s520 = vtos %v519
      %v521 = vstv %s520
      %522 = vst.msk [vmem:[%s352] sm:$0x1] %vm508, %v521
      %p523 = scmp.lt.s32.totalorder %s21, 1
      %s524 = scalar_select %p523, %s21, 1
      %s525 = smul.addr %s524, 8
      %s526 = scalar_lea.vmem %s6, %s525
      %p527 = scmp.lt.s32.totalorder %s21, 1
      %s528 = scalar_select %p527, %s21, 1
      %s529 = scalar_lea.vmem %s7, %s528
      %p530 = scmp.lt.s32.totalorder %s21, 1
      %s531 = scalar_select %p530, %s21, 1
      %s532 = scalar_lea.vmem %s8, %s531
      // Predicated region
      $region45: #{aux_ent_type_tower.1} parent=43 // pred_check
        %p533 = pneg %p180
      $region46: #{aux_ent_type_tower.1} parent=43 // pred_check_branch
        %535 = sbr.rel (%p533) target = $region48
      $region47: #{aux_ent_type_tower.1} parent=43 // pred_region
        _
      $region48: #{aux_ent_type_tower.1} parent=43 // pred_fallthru
        _
      // Predicated region
      $region49: #{aux_ent_type_tower.1} parent=43 // pred_check
        %p536 = pneg %p206
      $region50: #{aux_ent_type_tower.1} parent=43 // pred_check_branch
        %538 = sbr.rel (%p536) target = $region52
      $region51: #{aux_ent_type_tower.1} parent=43 // pred_region
        _
      $region52: #{aux_ent_type_tower.1} parent=43 // pred_fallthru
        _
      // Predicated region
      $region53: #{aux_ent_type_tower.1} parent=43 // pred_check
        %p539 = pneg %p232
      $region54: #{aux_ent_type_tower.1} parent=43 // pred_check_branch
        %541 = sbr.rel (%p539) target = $region56
      $region55: #{aux_ent_type_tower.1} parent=43 // pred_region
        _
      $region56: #{aux_ent_type_tower.1} parent=43 // pred_fallthru
        _
    $region44: #{aux_ent_type_tower.1} parent=5 // pred_fallthru
      _
    %p542 = scmp.le.s32.totalorder 2, %s16
    // Predicated region
    $region57: #{aux_ent_type_tower.1} parent=5 // pred_check
      %p543 = pneg %p542
    $region58: #{aux_ent_type_tower.1} parent=5 // pred_check_branch
      %545 = sbr.rel (%p543) target = $region60
    $region59: #{aux_ent_type_tower.1} parent=5 // pred_region
      %s546 = ssub.s32 %s16, 2
      // Predicated region
      $region61: #{aux_ent_type_tower.1} parent=59 // pred_check
        %p547 = pneg %p186
      $region62: #{aux_ent_type_tower.1} parent=59 // pred_check_branch
        %549 = sbr.rel (%p547) target = $region64
      $region63: #{aux_ent_type_tower.1} parent=59 // pred_region
        %p550 = scmp.lt.s32.totalorder %s22, 1
        %s551 = scalar_select %p550, %s22, 1
        %s552 = smul.addr %s551, 8
        %s553 = scalar_lea.vmem %s6, %s552
      $region64: #{aux_ent_type_tower.1} parent=59 // pred_fallthru
        _
      // Predicated region
      $region65: #{aux_ent_type_tower.1} parent=59 // pred_check
        %p554 = pneg %p212
      $region66: #{aux_ent_type_tower.1} parent=59 // pred_check_branch
        %556 = sbr.rel (%p554) target = $region68
      $region67: #{aux_ent_type_tower.1} parent=59 // pred_region
        %p557 = scmp.lt.s32.totalorder %s22, 1
        %s558 = scalar_select %p557, %s22, 1
        %s559 = scalar_lea.vmem %s7, %s558
      $region68: #{aux_ent_type_tower.1} parent=59 // pred_fallthru
        _
      // Predicated region
      $region69: #{aux_ent_type_tower.1} parent=59 // pred_check
        %p560 = pneg %p238
      $region70: #{aux_ent_type_tower.1} parent=59 // pred_check_branch
        %562 = sbr.rel (%p560) target = $region72
      $region71: #{aux_ent_type_tower.1} parent=59 // pred_region
        %p563 = scmp.lt.s32.totalorder %s22, 1
        %s564 = scalar_select %p563, %s22, 1
        %s565 = scalar_lea.vmem %s8, %s564
      $region72: #{aux_ent_type_tower.1} parent=59 // pred_fallthru
        _
    $region60: #{aux_ent_type_tower.1} parent=5 // pred_fallthru
      _
  $region6: #{aux_ent_type_tower.1} parent=0 // loop_footer
    %s20 = sadd.s32 1, %s16
  $region7: #{aux_ent_type_tower.1} parent=0 // loop_footer_branch
    %15 = sbr.rel target = $region3
  $region8: #{aux_ent_type_tower.1} parent=0 // loop_exit
    _

</llo_original>
